<compile_context>
chip_gen: v6e
topology: v6e:2x2x1
jax: 0.10.0
libtpu: 0.0.40
codegen_flags: <defaults>
</compile_context>

<pallas_src>
import numpy as np
import jax
import jax.numpy as jnp
from jax import lax
from jax.experimental import pallas as pl
from jax.experimental.pallas import tpu as pltpu


def _padding(downsample, kernel_size):
    """Compute required padding (same as the PyTorch module)."""
    return max(0, int(np.floor((kernel_size - downsample + 1) / 2)))


def _choose_nb(N, seg_rows, max_rows=4096):
    """Samples folded into one grid step.

    Prefer a grid of >= 2 steps (so dimension_semantics=("parallel",) can give
    both of v7x's TensorCores work) while keeping the per-step padded row count
    bounded (f32 accumulator / VMEM pressure).  NB always divides N, so no
    trailing samples are ever dropped.
    """
    divisors = [d for d in range(1, N + 1) if N % d == 0]
    cand = [d for d in divisors if N // d >= 2] or divisors
    cand2 = [d for d in cand if d * seg_rows <= max_rows]
    return max(cand2) if cand2 else min(cand)


def make_resblock1d(N, C_in, C_out, L, K, ds,
                    vmem_limit_bytes=64 * 1024 * 1024):
    """Builds the pallas_call for fixed static shapes."""
    if K % 2 == 0:
        raise ValueError("only odd kernel_size is supported "
                         "(the PyTorch module raises for even kernel_size)")
    p1 = _padding(1, K)                       # conv1 padding (stride 1, 'same')
    p2 = _padding(ds, K)                      # conv2 padding (stride ds)
    L1 = L                                    # conv1 output length
    L_out = (L1 + 2 * p2 - K) // ds + 1       # conv2 output length
    L_pool = L // ds if ds > 1 else L         # skip-path output length
    if L_pool != L_out:
        raise ValueError(
            "main-path / skip-path lengths differ (the PyTorch module would "
            f"also fail the residual add): conv2 gives {L_out}, "
            f"skip gives {L_pool}")

    # Per-sample padded segment length; rounded up to a multiple of ds so all
    # samples of a step share ONE global stride-ds read pattern for conv2 and
    # the maxpool.  SEG >= L + 2*p1 and SEG >= L1 + 2*p2.
    SEG = ds * ((L + K - 1 + ds - 1) // ds)
    SEGd = SEG // ds

    NB = _choose_nb(N, SEG)
    assert N % NB == 0
    grid = (N // NB,)

    ROWS = NB * SEG                 # staging-scratch rows per grid step
    R1 = ROWS - (K - 1)             # conv1 rows computed (incl. garbage rows)
    M2 = (NB - 1) * SEGd + L_out    # conv2 / skip rows computed

    has_pool = ds > 1
    has_1x1 = C_in != C_out

    def kernel(*refs):
        it = iter(refs)
        x_ref = next(it)                        # (NB, C_in, L)      f32 NCL
        y_ref = next(it)                        # (NB, C_in, L)      f32 NCL
        w1_ref = next(it)                       # (K*C_in, C_out)    bf16
        w2_ref = next(it)                       # (K*C_out, C_out)   bf16
        wsk_ref = next(it) if has_1x1 else None  # (C_in, C_out)     bf16
        s1_ref = next(it); o1_ref = next(it)    # (1, C_out) f32 folded BN1
        s2_ref = next(it); o2_ref = next(it)    # (1, C_out) f32 folded BN2
        xout_ref = next(it)                     # (NB, C_out, L_out) f32 NCL
        yout_ref = next(it)                     # (NB, C_out, L_out) f32 NCL
        xpad_sc = next(it)                      # (ROWS, C_in)  f32 staging
        hpad_sc = next(it)                      # (ROWS, C_out) f32 staging

        # ---- hoisted per-step loads (used once, but keep them together) ----
        s1 = s1_ref[...]; o1 = o1_ref[...]
        s2 = s2_ref[...]; o2 = o2_ref[...]
        w1 = w1_ref[...]
        w2 = w2_ref[...]
        wsk = wsk_ref[...] if has_1x1 else None

        # ---- zero the per-sample halo bands.  They are tiny, and zeroing
        #      them every step keeps each grid step self-contained, which is
        #      required for "parallel" semantics (a pl.when(pid==0)-guarded
        #      init would never run on the second core's private scratch). ----
        for b in range(NB):
            if p1 > 0:
                xpad_sc[b * SEG:b * SEG + p1, :] = jnp.zeros((p1, C_in),
                                                             jnp.float32)
            tail = SEG - p1 - L
            if tail > 0:
                xpad_sc[b * SEG + p1 + L:(b + 1) * SEG, :] = jnp.zeros(
                    (tail, C_in), jnp.float32)
        if p2 > 0:
            hpad_sc[0:p2, :] = jnp.zeros((p2, C_out), jnp.float32)
        tail2 = ROWS - p2 - R1
        if tail2 > 0:
            hpad_sc[p2 + R1:ROWS, :] = jnp.zeros((tail2, C_out), jnp.float32)

        # ---- stage x: NCL -> (L, C) rows per sample (zero halos around) ----
        for b in range(NB):
            xpad_sc[b * SEG + p1:b * SEG + p1 + L, :] = x_ref[b].T

        # ---- conv1: ONE fused im2col matmul for the whole step -------------
        x_all = xpad_sc[...]                                   # (ROWS, C_in)
        im1 = jnp.concatenate([x_all[t:t + R1, :] for t in range(K)], axis=-1)
        acc1 = jnp.dot(im1.astype(jnp.bfloat16), w1,
                       preferred_element_type=jnp.float32)     # (R1, C_out)

        # ---- bn1 (folded running stats) + relu; dropout1 = identity.
        #      Inter-sample garbage rows are masked to zero so they double as
        #      conv2's zero padding between samples. -------------------------
        h1 = jnp.maximum(acc1 * s1 + o1, 0.0)
        row_id = lax.broadcasted_iota(jnp.int32, (R1, 1), 0)
        h1 = jnp.where((row_id % SEG) < L1, h1, 0.0)
        hpad_sc[p2:p2 + R1, :] = h1

        # ---- conv2 (stride ds): ONE fused im2col matmul from stride-ds
        #      reads of the zero-banded conv1-output scratch ------------------
        if ds > 1:
            taps2 = [hpad_sc[pl.ds(t, M2, stride=ds), :] for t in range(K)]
        else:
            taps2 = [hpad_sc[pl.ds(t, M2), :] for t in range(K)]
        im2 = jnp.concatenate(taps2, axis=-1)
        acc2 = jnp.dot(im2.astype(jnp.bfloat16), w2,
                       preferred_element_type=jnp.float32)     # (M2, C_out)

        # ---- skip path: stage y over the (already consumed) x rows,
        #      maxpool via stride-ds reads, optional fused 1x1 conv -----------
        for b in range(NB):
            xpad_sc[b * SEG + p1:b * SEG + p1 + L, :] = y_ref[b].T
        if has_pool:
            ysk = xpad_sc[pl.ds(p1, M2, stride=ds), :]
            for r in range(1, ds):
                ysk = jnp.maximum(ysk, xpad_sc[pl.ds(p1 + r, M2, stride=ds), :])
        else:
            ysk = xpad_sc[pl.ds(p1, M2), :]
        if has_1x1:
            ysk = jnp.dot(ysk.astype(jnp.bfloat16), wsk,
                          preferred_element_type=jnp.float32)

        # ---- x += y ; y = x ; bn2 + relu ; dropout2 = identity --------------
        y_new = acc2 + ysk
        x_new = jnp.maximum(y_new * s2 + o2, 0.0)

        # ---- store back per sample in NCL (lane axis = L_out) ---------------
        for b in range(NB):
            sl = slice(b * SEGd, b * SEGd + L_out)
            yout_ref[b] = y_new[sl, :].T.astype(yout_ref.dtype)
            xout_ref[b] = x_new[sl, :].T.astype(xout_ref.dtype)

    in_specs = [
        pl.BlockSpec((NB, C_in, L), lambda n: (n, 0, 0)),       # x (NCL)
        pl.BlockSpec((NB, C_in, L), lambda n: (n, 0, 0)),       # y (NCL)
        pl.BlockSpec((K * C_in, C_out), lambda n: (0, 0)),      # W1 im2col
        pl.BlockSpec((K * C_out, C_out), lambda n: (0, 0)),     # W2 im2col
    ]
    if has_1x1:
        in_specs.append(pl.BlockSpec((C_in, C_out), lambda n: (0, 0)))
    in_specs += [pl.BlockSpec((1, C_out), lambda n: (0, 0))] * 4  # bn s/b x2

    out_specs = [
        pl.BlockSpec((NB, C_out, L_out), lambda n: (n, 0, 0)),  # x out
        pl.BlockSpec((NB, C_out, L_out), lambda n: (n, 0, 0)),  # y out
    ]

    f = pl.pallas_call(
        kernel,
        out_shape=(jax.ShapeDtypeStruct((N, C_out, L_out), jnp.float32),
                   jax.ShapeDtypeStruct((N, C_out, L_out), jnp.float32)),
        grid_spec=pltpu.PrefetchScalarGridSpec(
            num_scalar_prefetch=0,
            grid=grid,
            in_specs=in_specs,
            out_specs=out_specs,
            scratch_shapes=[pltpu.VMEM((ROWS, C_in), jnp.float32),
                            pltpu.VMEM((ROWS, C_out), jnp.float32)]),
        compiler_params=pltpu.CompilerParams(
            dimension_semantics=("parallel",),
            vmem_limit_bytes=vmem_limit_bytes),
    )
    return f, has_1x1


def resblock1d_forward(x_ncl, y_ncl, params, ds, K, eps=1e-5):
    """Wrapper: BN folding + weight relayout only (weight-sized work, no
    activation transposes / pads through HBM)."""
    N, C_in, L = x_ncl.shape
    w1, w2, wsk, g1, b1, m1, v1, g2, b2, m2, v2 = params
    C_out = w1.shape[0]

    f, has_1x1 = make_resblock1d(N, C_in, C_out, L, K, ds)

    x32 = x_ncl.astype(jnp.float32)
    y32 = y_ncl.astype(jnp.float32)

    # torch weight [O, I, K] -> im2col-flattened [K*I, O] (tap-major,
    # channel-minor, matching the in-kernel concat order); pre-cast to bf16
    # for the MXU (accumulation stays f32 inside the kernel).
    w1_k = jnp.transpose(w1, (2, 1, 0)).reshape(K * C_in, C_out).astype(
        jnp.bfloat16)
    w2_k = jnp.transpose(w2, (2, 1, 0)).reshape(K * C_out, C_out).astype(
        jnp.bfloat16)

    # fold eval-mode BatchNorm into per-channel scale / bias (f32)
    inv1 = g1 / jnp.sqrt(v1 + eps)
    inv2 = g2 / jnp.sqrt(v2 + eps)
    s1 = inv1.reshape(1, C_out).astype(jnp.float32)
    o1 = (b1 - m1 * inv1).reshape(1, C_out).astype(jnp.float32)
    s2 = inv2.reshape(1, C_out).astype(jnp.float32)
    o2 = (b2 - m2 * inv2).reshape(1, C_out).astype(jnp.float32)

    args = [x32, y32, w1_k, w2_k]
    if has_1x1:
        args.append(jnp.transpose(wsk[:, :, 0], (1, 0)).astype(jnp.bfloat16))
    args += [s1, o1, s2, o2]

    x_out, y_out = f(*args)
    return x_out, y_out                         # already NCL


def resblock1d_reference(x, y, params, ds, K, eps=1e-5):
    """Pure-JAX reference (NCL layout, eval-mode BN, dropout = identity)."""
    w1, w2, wsk, g1, b1, m1, v1, g2, b2, m2, v2 = params
    C_out, C_in = w1.shape[0], w1.shape[1]
    p1 = _padding(1, K)
    p2 = _padding(ds, K)
    dn = ('NCH', 'OIH', 'NCH')

    def bn(h, g, b, m, v):
        return ((h - m[None, :, None]) / jnp.sqrt(v[None, :, None] + eps)
                * g[None, :, None] + b[None, :, None])

    h = lax.conv_general_dilated(x, w1, (1,), [(p1, p1)], dimension_numbers=dn)
    h = jnp.maximum(bn(h, g1, b1, m1, v1), 0.0)
    h = lax.conv_general_dilated(h, w2, (ds,), [(p2, p2)], dimension_numbers=dn)

    ysk = y
    if ds > 1:
        ysk = lax.reduce_window(ysk, -jnp.inf, lax.max,
                                (1, 1, ds), (1, 1, ds), 'VALID')
    if C_in != C_out:
        ysk = lax.conv_general_dilated(ysk, wsk, (1,), [(0, 0)],
                                       dimension_numbers=dn)
    y_out = h + ysk
    x_out = jnp.maximum(bn(y_out, g2, b2, m2, v2), 0.0)
    return x_out, y_out


if __name__ == "__main__":
    # ResBlock1d(n_filters_in=4, n_filters_out=8, downsample=2,
    #            kernel_size=5, dropout_rate=0.1) in eval mode.
    N, C_in, C_out, L, K, ds = 2, 4, 8, 16, 5, 2

    key = jax.random.PRNGKey(0)
    keys = jax.random.split(key, 13)
    x = jax.random.normal(keys[0], (N, C_in, L), jnp.float32)
    y = jax.random.normal(keys[1], (N, C_in, L), jnp.float32)

    w1 = jax.random.normal(keys[2], (C_out, C_in, K), jnp.float32) * 0.3
    w2 = jax.random.normal(keys[3], (C_out, C_out, K), jnp.float32) * 0.3
    wsk = jax.random.normal(keys[4], (C_out, C_in, 1), jnp.float32) * 0.3
    g1 = jax.random.normal(keys[5], (C_out,), jnp.float32) * 0.1 + 1.0
    b1 = jax.random.normal(keys[6], (C_out,), jnp.float32) * 0.1
    m1 = jax.random.normal(keys[7], (C_out,), jnp.float32) * 0.1
    v1 = jax.random.uniform(keys[8], (C_out,), jnp.float32, 0.5, 1.5)
    g2 = jax.random.normal(keys[9], (C_out,), jnp.float32) * 0.1 + 1.0
    b2 = jax.random.normal(keys[10], (C_out,), jnp.float32) * 0.1
    m2 = jax.random.normal(keys[11], (C_out,), jnp.float32) * 0.1
    v2 = jax.random.uniform(keys[12], (C_out,), jnp.float32, 0.5, 1.5)
    params = (w1, w2, wsk, g1, b1, m1, v1, g2, b2, m2, v2)

    x_out, y_out = resblock1d_forward(x, y, params, ds, K)
    jax.block_until_ready((x_out, y_out))

    x_ref, y_ref = resblock1d_reference(x, y, params, ds, K)
    # Tolerance sized for bf16 MXU operands with f32 accumulation
    # (reference is pure f32); real indexing/layout bugs give O(1) errors.
    np.testing.assert_allclose(np.asarray(x_out), np.asarray(x_ref),
                               rtol=2e-2, atol=3e-2)
    np.testing.assert_allclose(np.asarray(y_out), np.asarray(y_ref),
                               rtol=2e-2, atol=3e-2)
    print("KERNEL_OK")
</pallas_src>

<mosaic_0001>
module attributes {stable_mosaic.version = 11 : i64} {
  func.func @kernel(%arg0: i32, %arg1: memref<1x4x16xf32, #tpu.memory_space<vmem>>, %arg2: memref<1x4x16xf32, #tpu.memory_space<vmem>>, %arg3: memref<20x8xbf16, #tpu.memory_space<vmem>>, %arg4: memref<40x8xbf16, #tpu.memory_space<vmem>>, %arg5: memref<4x8xbf16, #tpu.memory_space<vmem>>, %arg6: memref<1x8xf32, #tpu.memory_space<vmem>>, %arg7: memref<1x8xf32, #tpu.memory_space<vmem>>, %arg8: memref<1x8xf32, #tpu.memory_space<vmem>>, %arg9: memref<1x8xf32, #tpu.memory_space<vmem>>, %arg10: memref<1x8x8xf32, #tpu.memory_space<vmem>>, %arg11: memref<1x8x8xf32, #tpu.memory_space<vmem>>, %arg12: memref<20x4xf32, #tpu.memory_space<vmem>>, %arg13: memref<20x8xf32, #tpu.memory_space<vmem>>) attributes {dimension_semantics = [#tpu.dimension_semantics<parallel>], iteration_bounds = array<i64: 2>, scalar_prefetch = 0 : i64, scratch_operands = 2 : i64, tpu.core_type = #tpu.core_type<tc>, window_params = [{transform_indices = @transform_0, window_bounds = array<i64: 1, 4, 16>}, {transform_indices = @transform_1, window_bounds = array<i64: 1, 4, 16>}, {pipeline_mode = #tpu.pipeline_mode<synchronous>, transform_indices = @transform_2, window_bounds = array<i64: 20, 8>}, {pipeline_mode = #tpu.pipeline_mode<synchronous>, transform_indices = @transform_3, window_bounds = array<i64: 40, 8>}, {pipeline_mode = #tpu.pipeline_mode<synchronous>, transform_indices = @transform_4, window_bounds = array<i64: 4, 8>}, {pipeline_mode = #tpu.pipeline_mode<synchronous>, transform_indices = @transform_5, window_bounds = array<i64: 1, 8>}, {pipeline_mode = #tpu.pipeline_mode<synchronous>, transform_indices = @transform_6, window_bounds = array<i64: 1, 8>}, {pipeline_mode = #tpu.pipeline_mode<synchronous>, transform_indices = @transform_7, window_bounds = array<i64: 1, 8>}, {pipeline_mode = #tpu.pipeline_mode<synchronous>, transform_indices = @transform_8, window_bounds = array<i64: 1, 8>}, {transform_indices = @transform_9, window_bounds = array<i64: 1, 8, 8>}, {transform_indices = @transform_10, window_bounds = array<i64: 1, 8, 8>}]} {
    %c0 = arith.constant 0 : index
    %c0_0 = arith.constant 0 : index
    %0 = vector.load %arg6[%c0, %c0_0] : memref<1x8xf32, #tpu.memory_space<vmem>>, vector<1x8xf32>
    %c0_1 = arith.constant 0 : index
    %c0_2 = arith.constant 0 : index
    %1 = vector.load %arg7[%c0_1, %c0_2] : memref<1x8xf32, #tpu.memory_space<vmem>>, vector<1x8xf32>
    %c0_3 = arith.constant 0 : index
    %c0_4 = arith.constant 0 : index
    %2 = vector.load %arg8[%c0_3, %c0_4] : memref<1x8xf32, #tpu.memory_space<vmem>>, vector<1x8xf32>
    %c0_5 = arith.constant 0 : index
    %c0_6 = arith.constant 0 : index
    %3 = vector.load %arg9[%c0_5, %c0_6] : memref<1x8xf32, #tpu.memory_space<vmem>>, vector<1x8xf32>
    %c0_7 = arith.constant 0 : index
    %c0_8 = arith.constant 0 : index
    %4 = vector.load %arg3[%c0_7, %c0_8] : memref<20x8xbf16, #tpu.memory_space<vmem>>, vector<20x8xbf16>
    %c0_9 = arith.constant 0 : index
    %c0_10 = arith.constant 0 : index
    %5 = vector.load %arg4[%c0_9, %c0_10] : memref<40x8xbf16, #tpu.memory_space<vmem>>, vector<40x8xbf16>
    %c0_11 = arith.constant 0 : index
    %c0_12 = arith.constant 0 : index
    %6 = vector.load %arg5[%c0_11, %c0_12] : memref<4x8xbf16, #tpu.memory_space<vmem>>, vector<4x8xbf16>
    %cst = arith.constant 0.000000e+00 : f32
    %7 = vector.broadcast %cst : f32 to vector<2x4xf32>
    %c0_13 = arith.constant 0 : index
    %c0_14 = arith.constant 0 : index
    %8 = vector.load %arg12[%c0_13, %c0_14] : memref<20x4xf32, #tpu.memory_space<vmem>>, vector<2x4xf32>
    tpu.vector_store %arg12[%c0_13, %c0_14], %7 {strides = array<i32>} : memref<20x4xf32, #tpu.memory_space<vmem>>, vector<2x4xf32>,
    %cst_15 = arith.constant 0.000000e+00 : f32
    %9 = vector.broadcast %cst_15 : f32 to vector<2x4xf32>
    %c18 = arith.constant 18 : index
    %c0_16 = arith.constant 0 : index
    %10 = vector.load %arg12[%c18, %c0_16] : memref<20x4xf32, #tpu.memory_space<vmem>>, vector<2x4xf32>
    tpu.vector_store %arg12[%c18, %c0_16], %9 {strides = array<i32>} : memref<20x4xf32, #tpu.memory_space<vmem>>, vector<2x4xf32>,
    %cst_17 = arith.constant 0.000000e+00 : f32
    %11 = vector.broadcast %cst_17 : f32 to vector<2x8xf32>
    %c0_18 = arith.constant 0 : index
    %c0_19 = arith.constant 0 : index
    %12 = vector.load %arg13[%c0_18, %c0_19] : memref<20x8xf32, #tpu.memory_space<vmem>>, vector<2x8xf32>
    tpu.vector_store %arg13[%c0_18, %c0_19], %11 {strides = array<i32>} : memref<20x8xf32, #tpu.memory_space<vmem>>, vector<2x8xf32>,
    %cst_20 = arith.constant 0.000000e+00 : f32
    %13 = vector.broadcast %cst_20 : f32 to vector<2x8xf32>
    %c18_21 = arith.constant 18 : index
    %c0_22 = arith.constant 0 : index
    %14 = vector.load %arg13[%c18_21, %c0_22] : memref<20x8xf32, #tpu.memory_space<vmem>>, vector<2x8xf32>
    tpu.vector_store %arg13[%c18_21, %c0_22], %13 {strides = array<i32>} : memref<20x8xf32, #tpu.memory_space<vmem>>, vector<2x8xf32>,
    %c0_23 = arith.constant 0 : index
    %c0_24 = arith.constant 0 : index
    %c0_25 = arith.constant 0 : index
    %15 = vector.load %arg1[%c0_23, %c0_24, %c0_25] : memref<1x4x16xf32, #tpu.memory_space<vmem>>, vector<1x4x16xf32>
    %16 = vector.shape_cast %15 : vector<1x4x16xf32> to vector<4x16xf32>
    %17 = tpu.transpose %16, [1, 0] : vector<4x16xf32> -> vector<16x4xf32>
    %c2 = arith.constant 2 : index
    %c0_26 = arith.constant 0 : index
    %18 = vector.load %arg12[%c2, %c0_26] : memref<20x4xf32, #tpu.memory_space<vmem>>, vector<16x4xf32>
    tpu.vector_store %arg12[%c2, %c0_26], %17 {strides = array<i32>} : memref<20x4xf32, #tpu.memory_space<vmem>>, vector<16x4xf32>,
    %c0_27 = arith.constant 0 : index
    %c0_28 = arith.constant 0 : index
    %19 = vector.load %arg12[%c0_27, %c0_28] : memref<20x4xf32, #tpu.memory_space<vmem>>, vector<20x4xf32>
    %20 = vector.extract_strided_slice %19 {offsets = [0, 0], sizes = [16, 4], strides = [1, 1]} : vector<20x4xf32> to vector<16x4xf32>
    %21 = vector.extract_strided_slice %19 {offsets = [1, 0], sizes = [16, 4], strides = [1, 1]} : vector<20x4xf32> to vector<16x4xf32>
    %22 = vector.extract_strided_slice %19 {offsets = [2, 0], sizes = [16, 4], strides = [1, 1]} : vector<20x4xf32> to vector<16x4xf32>
    %23 = vector.extract_strided_slice %19 {offsets = [3, 0], sizes = [16, 4], strides = [1, 1]} : vector<20x4xf32> to vector<16x4xf32>
    %24 = vector.extract_strided_slice %19 {offsets = [4, 0], sizes = [16, 4], strides = [1, 1]} : vector<20x4xf32> to vector<16x4xf32>
    %25 = tpu.concatenate %20, %21, %22, %23, %24 in 1 : vector<16x4xf32>, vector<16x4xf32>, vector<16x4xf32>, vector<16x4xf32>, vector<16x4xf32> -> vector<16x20xf32>
    %26 = arith.truncf %25 : vector<16x20xf32> to vector<16x20xbf16>
    %cst_29 = arith.constant dense<0.000000e+00> : vector<16x8xf32>
    %27 = tpu.matmul %26, %4, %cst_29 {dimension_numbers = #tpu.dot_dimension_numbers<[1], [0], [0], [1], [0, 0, 1, 1], [], []>} : vector<16x20xbf16>, vector<20x8xbf16>, vector<16x8xf32> -> vector<16x8xf32>
    %28 = vector.broadcast %0 : vector<1x8xf32> to vector<16x8xf32>
    %29 = arith.mulf %27, %28 : vector<16x8xf32>
    %30 = vector.broadcast %1 : vector<1x8xf32> to vector<16x8xf32>
    %31 = arith.addf %29, %30 : vector<16x8xf32>
    %cst_30 = arith.constant 0.000000e+00 : f32
    %32 = vector.broadcast %cst_30 : f32 to vector<16x8xf32>
    %33 = arith.maximumf %31, %32 : vector<16x8xf32>
    %34 = tpu.iota {dimensions = array<i32: 0>} : vector<16x1xi32>
    %c20_i32 = arith.constant 20 : i32
    %c0_i32 = arith.constant 0 : i32
    %35 = arith.cmpi eq, %c20_i32, %c0_i32 : i32
    %c1_i32 = arith.constant 1 : i32
    %36 = arith.select %35, %c1_i32, %c20_i32 : i32
    %37 = vector.broadcast %36 : i32 to vector<16x1xi32>
    %38 = arith.remsi %34, %37 : vector<16x1xi32>
    %c0_i32_31 = arith.constant 0 : i32
    %39 = vector.broadcast %c0_i32_31 : i32 to vector<16x1xi32>
    %40 = arith.cmpi ne, %38, %39 : vector<16x1xi32>
    %c0_i32_32 = arith.constant 0 : i32
    %41 = vector.broadcast %c0_i32_32 : i32 to vector<16x1xi32>
    %42 = arith.cmpi slt, %38, %41 : vector<16x1xi32>
    %c0_i32_33 = arith.constant 0 : i32
    %43 = arith.cmpi slt, %36, %c0_i32_33 : i32
    %44 = vector.broadcast %43 : i1 to vector<16x1xi1>
    %45 = vector.broadcast %44 : vector<16x1xi1> to vector<16x1xi1>
    %46 = arith.xori %42, %45 : vector<16x1xi1>
    %47 = arith.andi %46, %40 : vector<16x1xi1>
    %48 = vector.broadcast %36 : i32 to vector<16x1xi32>
    %49 = arith.addi %38, %48 : vector<16x1xi32>
    %50 = arith.select %47, %49, %38 : vector<16x1xi1>, vector<16x1xi32>
    %c16_i32 = arith.constant 16 : i32
    %51 = vector.broadcast %c16_i32 : i32 to vector<16x1xi32>
    %52 = arith.cmpi slt, %50, %51 : vector<16x1xi32>
    %cst_34 = arith.constant 0.000000e+00 : f32
    %53 = vector.shape_cast %52 : vector<16x1xi1> to vector<16x1xi1>
    %54 = vector.broadcast %53 : vector<16x1xi1> to vector<16x8xi1>
    %55 = vector.broadcast %cst_34 : f32 to vector<16x8xf32>
    %56 = arith.select %54, %33, %55 : vector<16x8xi1>, vector<16x8xf32>
    %c2_35 = arith.constant 2 : index
    %c0_36 = arith.constant 0 : index
    %57 = vector.load %arg13[%c2_35, %c0_36] : memref<20x8xf32, #tpu.memory_space<vmem>>, vector<16x8xf32>
    tpu.vector_store %arg13[%c2_35, %c0_36], %56 {strides = array<i32>} : memref<20x8xf32, #tpu.memory_space<vmem>>, vector<16x8xf32>,
    %c0_37 = arith.constant 0 : index
    %c0_38 = arith.constant 0 : index
    %58 = tpu.strided_load %arg13[%c0_37, %c0_38] {strides = array<i32: 2, 1>} : memref<20x8xf32, #tpu.memory_space<vmem>>, vector<8x8xf32>
    %c1 = arith.constant 1 : index
    %c0_39 = arith.constant 0 : index
    %59 = tpu.strided_load %arg13[%c1, %c0_39] {strides = array<i32: 2, 1>} : memref<20x8xf32, #tpu.memory_space<vmem>>, vector<8x8xf32>
    %c2_40 = arith.constant 2 : index
    %c0_41 = arith.constant 0 : index
    %60 = tpu.strided_load %arg13[%c2_40, %c0_41] {strides = array<i32: 2, 1>} : memref<20x8xf32, #tpu.memory_space<vmem>>, vector<8x8xf32>
    %c3 = arith.constant 3 : index
    %c0_42 = arith.constant 0 : index
    %61 = tpu.strided_load %arg13[%c3, %c0_42] {strides = array<i32: 2, 1>} : memref<20x8xf32, #tpu.memory_space<vmem>>, vector<8x8xf32>
    %c4 = arith.constant 4 : index
    %c0_43 = arith.constant 0 : index
    %62 = tpu.strided_load %arg13[%c4, %c0_43] {strides = array<i32: 2, 1>} : memref<20x8xf32, #tpu.memory_space<vmem>>, vector<8x8xf32>
    %63 = tpu.concatenate %58, %59, %60, %61, %62 in 1 : vector<8x8xf32>, vector<8x8xf32>, vector<8x8xf32>, vector<8x8xf32>, vector<8x8xf32> -> vector<8x40xf32>
    %64 = arith.truncf %63 : vector<8x40xf32> to vector<8x40xbf16>
    %cst_44 = arith.constant dense<0.000000e+00> : vector<8x8xf32>
    %65 = tpu.matmul %64, %5, %cst_44 {dimension_numbers = #tpu.dot_dimension_numbers<[1], [0], [0], [1], [0, 0, 1, 1], [], []>} : vector<8x40xbf16>, vector<40x8xbf16>, vector<8x8xf32> -> vector<8x8xf32>
    %c0_45 = arith.constant 0 : index
    %c0_46 = arith.constant 0 : index
    %c0_47 = arith.constant 0 : index
    %66 = vector.load %arg2[%c0_45, %c0_46, %c0_47] : memref<1x4x16xf32, #tpu.memory_space<vmem>>, vector<1x4x16xf32>
    %67 = vector.shape_cast %66 : vector<1x4x16xf32> to vector<4x16xf32>
    %68 = tpu.transpose %67, [1, 0] : vector<4x16xf32> -> vector<16x4xf32>
    %c2_48 = arith.constant 2 : index
    %c0_49 = arith.constant 0 : index
    %69 = vector.load %arg12[%c2_48, %c0_49] : memref<20x4xf32, #tpu.memory_space<vmem>>, vector<16x4xf32>
    tpu.vector_store %arg12[%c2_48, %c0_49], %68 {strides = array<i32>} : memref<20x4xf32, #tpu.memory_space<vmem>>, vector<16x4xf32>,
    %c2_50 = arith.constant 2 : index
    %c0_51 = arith.constant 0 : index
    %70 = tpu.strided_load %arg12[%c2_50, %c0_51] {strides = array<i32: 2, 1>} : memref<20x4xf32, #tpu.memory_space<vmem>>, vector<8x4xf32>
    %c3_52 = arith.constant 3 : index
    %c0_53 = arith.constant 0 : index
    %71 = tpu.strided_load %arg12[%c3_52, %c0_53] {strides = array<i32: 2, 1>} : memref<20x4xf32, #tpu.memory_space<vmem>>, vector<8x4xf32>
    %72 = arith.maximumf %70, %71 : vector<8x4xf32>
    %73 = arith.truncf %72 : vector<8x4xf32> to vector<8x4xbf16>
    %cst_54 = arith.constant dense<0.000000e+00> : vector<8x8xf32>
    %74 = tpu.matmul %73, %6, %cst_54 {dimension_numbers = #tpu.dot_dimension_numbers<[1], [0], [0], [1], [0, 0, 1, 1], [], []>} : vector<8x4xbf16>, vector<4x8xbf16>, vector<8x8xf32> -> vector<8x8xf32>
    %75 = arith.addf %65, %74 : vector<8x8xf32>
    %76 = vector.broadcast %2 : vector<1x8xf32> to vector<8x8xf32>
    %77 = arith.mulf %75, %76 : vector<8x8xf32>
    %78 = vector.broadcast %3 : vector<1x8xf32> to vector<8x8xf32>
    %79 = arith.addf %77, %78 : vector<8x8xf32>
    %cst_55 = arith.constant 0.000000e+00 : f32
    %80 = vector.broadcast %cst_55 : f32 to vector<8x8xf32>
    %81 = arith.maximumf %79, %80 : vector<8x8xf32>
    %82 = tpu.transpose %75, [1, 0] : vector<8x8xf32> -> vector<8x8xf32>
    %c0_56 = arith.constant 0 : index
    %c0_57 = arith.constant 0 : index
    %c0_58 = arith.constant 0 : index
    %83 = vector.load %arg11[%c0_56, %c0_57, %c0_58] : memref<1x8x8xf32, #tpu.memory_space<vmem>>, vector<1x8x8xf32>
    %84 = vector.shape_cast %83 : vector<1x8x8xf32> to vector<8x8xf32>
    %85 = vector.shape_cast %82 : vector<8x8xf32> to vector<1x8x8xf32>
    tpu.vector_store %arg11[%c0_56, %c0_57, %c0_58], %85 {strides = array<i32>} : memref<1x8x8xf32, #tpu.memory_space<vmem>>, vector<1x8x8xf32>,
    %86 = tpu.transpose %81, [1, 0] : vector<8x8xf32> -> vector<8x8xf32>
    %c0_59 = arith.constant 0 : index
    %c0_60 = arith.constant 0 : index
    %c0_61 = arith.constant 0 : index
    %87 = vector.load %arg10[%c0_59, %c0_60, %c0_61] : memref<1x8x8xf32, #tpu.memory_space<vmem>>, vector<1x8x8xf32>
    %88 = vector.shape_cast %87 : vector<1x8x8xf32> to vector<8x8xf32>
    %89 = vector.shape_cast %86 : vector<8x8xf32> to vector<1x8x8xf32>
    tpu.vector_store %arg10[%c0_59, %c0_60, %c0_61], %89 {strides = array<i32>} : memref<1x8x8xf32, #tpu.memory_space<vmem>>, vector<1x8x8xf32>,
    return
  }
  func.func @transform_0(%arg0: i32) -> (i32, i32, i32) {
    %c0_i32 = arith.constant 0 : i32
    %c0_i32_0 = arith.constant 0 : i32
    %c0_i32_1 = arith.constant 0 : i32
    return %arg0, %c0_i32, %c0_i32_0 : i32, i32, i32
  }
  func.func @transform_1(%arg0: i32) -> (i32, i32, i32) {
    %c0_i32 = arith.constant 0 : i32
    %c0_i32_0 = arith.constant 0 : i32
    %c0_i32_1 = arith.constant 0 : i32
    return %arg0, %c0_i32, %c0_i32_0 : i32, i32, i32
  }
  func.func @transform_2(%arg0: i32) -> (i32, i32) {
    %c0_i32 = arith.constant 0 : i32
    %c0_i32_0 = arith.constant 0 : i32
    %c0_i32_1 = arith.constant 0 : i32
    return %c0_i32, %c0_i32_0 : i32, i32
  }
  func.func @transform_3(%arg0: i32) -> (i32, i32) {
    %c0_i32 = arith.constant 0 : i32
    %c0_i32_0 = arith.constant 0 : i32
    %c0_i32_1 = arith.constant 0 : i32
    return %c0_i32, %c0_i32_0 : i32, i32
  }
  func.func @transform_4(%arg0: i32) -> (i32, i32) {
    %c0_i32 = arith.constant 0 : i32
    %c0_i32_0 = arith.constant 0 : i32
    %c0_i32_1 = arith.constant 0 : i32
    return %c0_i32, %c0_i32_0 : i32, i32
  }
  func.func @transform_5(%arg0: i32) -> (i32, i32) {
    %c0_i32 = arith.constant 0 : i32
    %c0_i32_0 = arith.constant 0 : i32
    %c0_i32_1 = arith.constant 0 : i32
    return %c0_i32, %c0_i32_0 : i32, i32
  }
  func.func @transform_6(%arg0: i32) -> (i32, i32) {
    %c0_i32 = arith.constant 0 : i32
    %c0_i32_0 = arith.constant 0 : i32
    %c0_i32_1 = arith.constant 0 : i32
    return %c0_i32, %c0_i32_0 : i32, i32
  }
  func.func @transform_7(%arg0: i32) -> (i32, i32) {
    %c0_i32 = arith.constant 0 : i32
    %c0_i32_0 = arith.constant 0 : i32
    %c0_i32_1 = arith.constant 0 : i32
    return %c0_i32, %c0_i32_0 : i32, i32
  }
  func.func @transform_8(%arg0: i32) -> (i32, i32) {
    %c0_i32 = arith.constant 0 : i32
    %c0_i32_0 = arith.constant 0 : i32
    %c0_i32_1 = arith.constant 0 : i32
    return %c0_i32, %c0_i32_0 : i32, i32
  }
  func.func @transform_9(%arg0: i32) -> (i32, i32, i32) {
    %c0_i32 = arith.constant 0 : i32
    %c0_i32_0 = arith.constant 0 : i32
    %c0_i32_1 = arith.constant 0 : i32
    return %arg0, %c0_i32, %c0_i32_0 : i32, i32, i32
  }
  func.func @transform_10(%arg0: i32) -> (i32, i32, i32) {
    %c0_i32 = arith.constant 0 : i32
    %c0_i32_0 = arith.constant 0 : i32
    %c0_i32_1 = arith.constant 0 : i32
    return %arg0, %c0_i32, %c0_i32_0 : i32, i32, i32
  }
}

</mosaic_0001>

<llo_original>
// kernel: tpu_custom_call.1
$region0: #{tpu_custom_call.1}
  #allocation0 [shape = 'u32[]', space=smem, size = 0x4, offset = 0x4, fixed_abs, tag = 'smem constant byte address 0x4 - core index']
  #allocation1 [shape = 'u32[144,128]{1,0:T(1,128)}', space=vmem, size = 0x12000, scoped, tag = 'internal scratch']
  #allocation2 [shape = 'f32[20,4]{1,0:T(8,128)}', space=vmem, size = 0x3000, scoped, tag = 'scratch operand']
  #allocation3 [shape = 'f32[20,8]{1,0:T(8,128)}', space=vmem, size = 0x3000, scoped, tag = 'scratch operand']
  %s0 = inlined_call_operand.vmem [shape: f32[2,4,16], index: 0, kind: input, shape index: {}]
  %s1 = inlined_call_operand.vmem [shape: f32[2,4,16], index: 1, kind: input, shape index: {}]
  %s2 = inlined_call_operand.vmem [shape: bf16[20,8], index: 2, kind: input, shape index: {}]
  %s3 = inlined_call_operand.vmem [shape: bf16[40,8], index: 3, kind: input, shape index: {}]
  %s4 = inlined_call_operand.vmem [shape: bf16[4,8], index: 4, kind: input, shape index: {}]
  %s5 = inlined_call_operand.vmem [shape: f32[1,8], index: 5, kind: input, shape index: {}]
  %s6 = inlined_call_operand.vmem [shape: f32[1,8], index: 6, kind: input, shape index: {}]
  %s7 = inlined_call_operand.vmem [shape: f32[1,8], index: 7, kind: input, shape index: {}]
  %s8 = inlined_call_operand.vmem [shape: f32[1,8], index: 8, kind: input, shape index: {}]
  %s9 = inlined_call_operand.hbm [shape: f32[2,8,8], index: 9, kind: output, shape index: {0}]
  %s10 = inlined_call_operand.hbm [shape: f32[2,8,8], index: 10, kind: output, shape index: {1}]
  %11 = xla_tuple %s9, %s10
  %s12 = sld [smem:[#allocation0]]
  $region77: #{tpu_custom_call.1} parent=0
    _
  %s14 = ssub.s32 1, %s12
  %s15 = scalar_select 0, %s14, %s12
  $region1: #{tpu_custom_call.1} parent=0
    #allocation4 [shape = 'u8[8192]{0}', space=vmem, size = 0x2000, scoped, tag = 'output window, operand 0']
    #allocation5 [shape = 's32[2]{0}', space=sflag, size = 0x8, scoped, tag = 'scoped memory for tpu_custom_call.1']
    #allocation6 [shape = 'u8[8192]{0}', space=vmem, size = 0x2000, scoped, tag = 'output window, operand 1']
    #allocation7 [shape = 's32[2]{0}', space=sflag, size = 0x8, scoped, tag = 'scoped memory for tpu_custom_call.1']
    %16 = vsyncpa [#allocation5], 0
    %s17 = scalar_lea.sflag [#allocation5], 1
    %18 = vsyncpa %s17, 0
    %19 = vsyncpa [#allocation7], 0
    %s20 = scalar_lea.sflag [#allocation7], 1
    %21 = vsyncpa %s20, 0
    loop: start=0, step=1, limit=4
    $region2: #{tpu_custom_call.1} parent=1 // loop_pre_header
      _
    $region3: #{tpu_custom_call.1} parent=1 // loop_header
      %s23 = sphi 0, %s27
      %p24 = scmp.ge.s32.totalorder %s23, 4
      %s33 = sphi 0, %s35
      %s36 = sphi 0, %s33
      %s37 = sphi 0, %s36
      %s53 = sphi 0, %s37
      %s59 = sphi 0, %s61
      %s62 = sphi 0, %s59
      %s63 = sphi 0, %s62
      %s79 = sphi 0, %s63
      %s83 = sphi 0, %s83
      %s85 = sphi 0, %s83
      %s86 = sphi 0, %s85
      %s100 = sphi 0, %s86
      %s104 = sphi 0, %s104
      %s106 = sphi 0, %s104
      %s107 = sphi 0, %s106
      %s121 = sphi 0, %s107
      %s125 = sphi 0, %s125
      %s127 = sphi 0, %s125
      %s128 = sphi 0, %s127
      %s142 = sphi 0, %s128
      %s146 = sphi 0, %s146
      %s148 = sphi 0, %s146
      %s149 = sphi 0, %s148
      %s163 = sphi 0, %s149
      %s167 = sphi 0, %s167
      %s169 = sphi 0, %s167
      %s170 = sphi 0, %s169
      %s184 = sphi 0, %s170
      %s188 = sphi 0, %s188
      %s190 = sphi 0, %s188
      %s191 = sphi 0, %s190
      %s205 = sphi 0, %s191
      %s209 = sphi 0, %s209
      %s211 = sphi 0, %s209
      %s212 = sphi 0, %s211
      %s226 = sphi 0, %s212
      %s232 = sphi 0, %s234
      %s235 = sphi 0, %s232
      %s236 = sphi 0, %s235
      %s252 = sphi 0, %s236
      %s258 = sphi 0, %s260
      %s261 = sphi 0, %s258
      %s262 = sphi 0, %s261
      %s278 = sphi 0, %s262
    $region4: #{tpu_custom_call.1} parent=1 // loop_header_branch
      %26 = sbr.rel (%p24) target = $region8
    $region5: #{tpu_custom_call.1} parent=1 // loop_body
      %s28 = ssub.s32 %s23, 1
      %s29 = ssub.s32 %s23, 2
      %s30 = sadd.s32 %s23, 1
      %s31 = ssub.s32 %s23, %s30
      %p32 = scmp.eq.s32.totalorder %s31, 0
      %s34 = sadd.s32 %s33, 1
      %s35 = scalar_select %p32, %s33, %s34
      %p38 = pneg %p32
      %p39 = scmp.eq.s32.totalorder %s23, 1
      %p40 = por %p38, %p39
      %p41 = scmp.ne.s32.totalorder %s33, %s36
      %p42 = scmp.eq.s32.totalorder %s23, 0
      %p43 = por %p41, %p42
      %p44 = scmp.ne.s32.totalorder %s33, %s36
      %p45 = scmp.eq.s32.totalorder %s28, 1
      %p46 = por %p44, %p45
      %p47 = scmp.ne.s32.totalorder %s36, %s37
      %p48 = scmp.eq.s32.totalorder %s28, 0
      %p49 = por %p47, %p48
      %p50 = scmp.ne.s32.totalorder %s36, %s37
      %p51 = scmp.eq.s32.totalorder %s29, 1
      %p52 = por %p50, %p51
      %p54 = scmp.ne.s32.totalorder %s37, %s53
      %p55 = scmp.eq.s32.totalorder %s29, 0
      %p56 = por %p54, %p55
      %s57 = ssub.s32 %s23, %s30
      %p58 = scmp.eq.s32.totalorder %s57, 0
      %s60 = sadd.s32 %s59, 1
      %s61 = scalar_select %p58, %s59, %s60
      %p64 = pneg %p58
      %p65 = scmp.eq.s32.totalorder %s23, 1
      %p66 = por %p64, %p65
      %p67 = scmp.ne.s32.totalorder %s59, %s62
      %p68 = scmp.eq.s32.totalorder %s23, 0
      %p69 = por %p67, %p68
      %p70 = scmp.ne.s32.totalorder %s59, %s62
      %p71 = scmp.eq.s32.totalorder %s28, 1
      %p72 = por %p70, %p71
      %p73 = scmp.ne.s32.totalorder %s62, %s63
      %p74 = scmp.eq.s32.totalorder %s28, 0
      %p75 = por %p73, %p74
      %p76 = scmp.ne.s32.totalorder %s62, %s63
      %p77 = scmp.eq.s32.totalorder %s29, 1
      %p78 = por %p76, %p77
      %p80 = scmp.ne.s32.totalorder %s63, %s79
      %p81 = scmp.eq.s32.totalorder %s29, 0
      %p82 = por %p80, %p81
      %s84 = sadd.s32 %s83, 1
      %p87 = scmp.eq.s32.totalorder %s23, 1
      %p88 = scmp.ne.s32.totalorder %s83, %s85
      %p89 = scmp.eq.s32.totalorder %s23, 0
      %p90 = por %p88, %p89
      %p91 = scmp.ne.s32.totalorder %s83, %s85
      %p92 = scmp.eq.s32.totalorder %s28, 1
      %p93 = por %p91, %p92
      %p94 = scmp.ne.s32.totalorder %s85, %s86
      %p95 = scmp.eq.s32.totalorder %s28, 0
      %p96 = por %p94, %p95
      %p97 = scmp.ne.s32.totalorder %s85, %s86
      %p98 = scmp.eq.s32.totalorder %s29, 1
      %p99 = por %p97, %p98
      %p101 = scmp.ne.s32.totalorder %s86, %s100
      %p102 = scmp.eq.s32.totalorder %s29, 0
      %p103 = por %p101, %p102
      %s105 = sadd.s32 %s104, 1
      %p108 = scmp.eq.s32.totalorder %s23, 1
      %p109 = scmp.ne.s32.totalorder %s104, %s106
      %p110 = scmp.eq.s32.totalorder %s23, 0
      %p111 = por %p109, %p110
      %p112 = scmp.ne.s32.totalorder %s104, %s106
      %p113 = scmp.eq.s32.totalorder %s28, 1
      %p114 = por %p112, %p113
      %p115 = scmp.ne.s32.totalorder %s106, %s107
      %p116 = scmp.eq.s32.totalorder %s28, 0
      %p117 = por %p115, %p116
      %p118 = scmp.ne.s32.totalorder %s106, %s107
      %p119 = scmp.eq.s32.totalorder %s29, 1
      %p120 = por %p118, %p119
      %p122 = scmp.ne.s32.totalorder %s107, %s121
      %p123 = scmp.eq.s32.totalorder %s29, 0
      %p124 = por %p122, %p123
      %s126 = sadd.s32 %s125, 1
      %p129 = scmp.eq.s32.totalorder %s23, 1
      %p130 = scmp.ne.s32.totalorder %s125, %s127
      %p131 = scmp.eq.s32.totalorder %s23, 0
      %p132 = por %p130, %p131
      %p133 = scmp.ne.s32.totalorder %s125, %s127
      %p134 = scmp.eq.s32.totalorder %s28, 1
      %p135 = por %p133, %p134
      %p136 = scmp.ne.s32.totalorder %s127, %s128
      %p137 = scmp.eq.s32.totalorder %s28, 0
      %p138 = por %p136, %p137
      %p139 = scmp.ne.s32.totalorder %s127, %s128
      %p140 = scmp.eq.s32.totalorder %s29, 1
      %p141 = por %p139, %p140
      %p143 = scmp.ne.s32.totalorder %s128, %s142
      %p144 = scmp.eq.s32.totalorder %s29, 0
      %p145 = por %p143, %p144
      %s147 = sadd.s32 %s146, 1
      %p150 = scmp.eq.s32.totalorder %s23, 1
      %p151 = scmp.ne.s32.totalorder %s146, %s148
      %p152 = scmp.eq.s32.totalorder %s23, 0
      %p153 = por %p151, %p152
      %p154 = scmp.ne.s32.totalorder %s146, %s148
      %p155 = scmp.eq.s32.totalorder %s28, 1
      %p156 = por %p154, %p155
      %p157 = scmp.ne.s32.totalorder %s148, %s149
      %p158 = scmp.eq.s32.totalorder %s28, 0
      %p159 = por %p157, %p158
      %p160 = scmp.ne.s32.totalorder %s148, %s149
      %p161 = scmp.eq.s32.totalorder %s29, 1
      %p162 = por %p160, %p161
      %p164 = scmp.ne.s32.totalorder %s149, %s163
      %p165 = scmp.eq.s32.totalorder %s29, 0
      %p166 = por %p164, %p165
      %s168 = sadd.s32 %s167, 1
      %p171 = scmp.eq.s32.totalorder %s23, 1
      %p172 = scmp.ne.s32.totalorder %s167, %s169
      %p173 = scmp.eq.s32.totalorder %s23, 0
      %p174 = por %p172, %p173
      %p175 = scmp.ne.s32.totalorder %s167, %s169
      %p176 = scmp.eq.s32.totalorder %s28, 1
      %p177 = por %p175, %p176
      %p178 = scmp.ne.s32.totalorder %s169, %s170
      %p179 = scmp.eq.s32.totalorder %s28, 0
      %p180 = por %p178, %p179
      %p181 = scmp.ne.s32.totalorder %s169, %s170
      %p182 = scmp.eq.s32.totalorder %s29, 1
      %p183 = por %p181, %p182
      %p185 = scmp.ne.s32.totalorder %s170, %s184
      %p186 = scmp.eq.s32.totalorder %s29, 0
      %p187 = por %p185, %p186
      %s189 = sadd.s32 %s188, 1
      %p192 = scmp.eq.s32.totalorder %s23, 1
      %p193 = scmp.ne.s32.totalorder %s188, %s190
      %p194 = scmp.eq.s32.totalorder %s23, 0
      %p195 = por %p193, %p194
      %p196 = scmp.ne.s32.totalorder %s188, %s190
      %p197 = scmp.eq.s32.totalorder %s28, 1
      %p198 = por %p196, %p197
      %p199 = scmp.ne.s32.totalorder %s190, %s191
      %p200 = scmp.eq.s32.totalorder %s28, 0
      %p201 = por %p199, %p200
      %p202 = scmp.ne.s32.totalorder %s190, %s191
      %p203 = scmp.eq.s32.totalorder %s29, 1
      %p204 = por %p202, %p203
      %p206 = scmp.ne.s32.totalorder %s191, %s205
      %p207 = scmp.eq.s32.totalorder %s29, 0
      %p208 = por %p206, %p207
      %s210 = sadd.s32 %s209, 1
      %p213 = scmp.eq.s32.totalorder %s23, 1
      %p214 = scmp.ne.s32.totalorder %s209, %s211
      %p215 = scmp.eq.s32.totalorder %s23, 0
      %p216 = por %p214, %p215
      %p217 = scmp.ne.s32.totalorder %s209, %s211
      %p218 = scmp.eq.s32.totalorder %s28, 1
      %p219 = por %p217, %p218
      %p220 = scmp.ne.s32.totalorder %s211, %s212
      %p221 = scmp.eq.s32.totalorder %s28, 0
      %p222 = por %p220, %p221
      %p223 = scmp.ne.s32.totalorder %s211, %s212
      %p224 = scmp.eq.s32.totalorder %s29, 1
      %p225 = por %p223, %p224
      %p227 = scmp.ne.s32.totalorder %s212, %s226
      %p228 = scmp.eq.s32.totalorder %s29, 0
      %p229 = por %p227, %p228
      %s230 = ssub.s32 %s23, %s30
      %p231 = scmp.eq.s32.totalorder %s230, 0
      %s233 = sadd.s32 %s232, 1
      %s234 = scalar_select %p231, %s232, %s233
      %p237 = pneg %p231
      %p238 = scmp.eq.s32.totalorder %s23, 1
      %p239 = por %p237, %p238
      %p240 = scmp.ne.s32.totalorder %s232, %s235
      %p241 = scmp.eq.s32.totalorder %s23, 0
      %p242 = por %p240, %p241
      %p243 = scmp.ne.s32.totalorder %s232, %s235
      %p244 = scmp.eq.s32.totalorder %s28, 1
      %p245 = por %p243, %p244
      %p246 = scmp.ne.s32.totalorder %s235, %s236
      %p247 = scmp.eq.s32.totalorder %s28, 0
      %p248 = por %p246, %p247
      %p249 = scmp.ne.s32.totalorder %s235, %s236
      %p250 = scmp.eq.s32.totalorder %s29, 1
      %p251 = por %p249, %p250
      %p253 = scmp.ne.s32.totalorder %s236, %s252
      %p254 = scmp.eq.s32.totalorder %s29, 0
      %p255 = por %p253, %p254
      %s256 = ssub.s32 %s23, %s30
      %p257 = scmp.eq.s32.totalorder %s256, 0
      %s259 = sadd.s32 %s258, 1
      %s260 = scalar_select %p257, %s258, %s259
      %p263 = pneg %p257
      %p264 = scmp.eq.s32.totalorder %s23, 1
      %p265 = por %p263, %p264
      %p266 = scmp.ne.s32.totalorder %s258, %s261
      %p267 = scmp.eq.s32.totalorder %s23, 0
      %p268 = por %p266, %p267
      %p269 = scmp.ne.s32.totalorder %s258, %s261
      %p270 = scmp.eq.s32.totalorder %s28, 1
      %p271 = por %p269, %p270
      %p272 = scmp.ne.s32.totalorder %s261, %s262
      %p273 = scmp.eq.s32.totalorder %s28, 0
      %p274 = por %p272, %p273
      %p275 = scmp.ne.s32.totalorder %s261, %s262
      %p276 = scmp.eq.s32.totalorder %s29, 1
      %p277 = por %p275, %p276
      %p279 = scmp.ne.s32.totalorder %s262, %s278
      %p280 = scmp.eq.s32.totalorder %s29, 0
      %p281 = por %p279, %p280
      %p282 = scmp.le.s32.totalorder 1, %s23
      %p283 = scmp.lt.s32.totalorder %s23, 3
      %p284 = pnand %p282, %p283
      %p285 = pneg %p284
      // Predicated region
      $region9: #{tpu_custom_call.1} parent=5 // pred_check
        _
      $region10: #{tpu_custom_call.1} parent=5 // pred_check_branch
        %287 = sbr.rel (%p284) target = $region12
      $region11: #{tpu_custom_call.1} parent=5 // pred_region
        %s288 = ssub.s32 %s23, 1
        // Predicated region
        $region13: #{tpu_custom_call.1} parent=11 // pred_check
          %p289 = pneg %p96
        $region14: #{tpu_custom_call.1} parent=11 // pred_check_branch
          %291 = sbr.rel (%p289) target = $region16
        $region15: #{tpu_custom_call.1} parent=11 // pred_region
          _
        $region16: #{tpu_custom_call.1} parent=11 // pred_fallthru
          _
        // Predicated region
        $region17: #{tpu_custom_call.1} parent=11 // pred_check
          %p292 = pneg %p117
        $region18: #{tpu_custom_call.1} parent=11 // pred_check_branch
          %294 = sbr.rel (%p292) target = $region20
        $region19: #{tpu_custom_call.1} parent=11 // pred_region
          _
        $region20: #{tpu_custom_call.1} parent=11 // pred_fallthru
          _
        // Predicated region
        $region21: #{tpu_custom_call.1} parent=11 // pred_check
          %p295 = pneg %p138
        $region22: #{tpu_custom_call.1} parent=11 // pred_check_branch
          %297 = sbr.rel (%p295) target = $region24
        $region23: #{tpu_custom_call.1} parent=11 // pred_region
          _
        $region24: #{tpu_custom_call.1} parent=11 // pred_fallthru
          _
        // Predicated region
        $region25: #{tpu_custom_call.1} parent=11 // pred_check
          %p298 = pneg %p159
        $region26: #{tpu_custom_call.1} parent=11 // pred_check_branch
          %300 = sbr.rel (%p298) target = $region28
        $region27: #{tpu_custom_call.1} parent=11 // pred_region
          _
        $region28: #{tpu_custom_call.1} parent=11 // pred_fallthru
          _
        // Predicated region
        $region29: #{tpu_custom_call.1} parent=11 // pred_check
          %p301 = pneg %p180
        $region30: #{tpu_custom_call.1} parent=11 // pred_check_branch
          %303 = sbr.rel (%p301) target = $region32
        $region31: #{tpu_custom_call.1} parent=11 // pred_region
          _
        $region32: #{tpu_custom_call.1} parent=11 // pred_fallthru
          _
        // Predicated region
        $region33: #{tpu_custom_call.1} parent=11 // pred_check
          %p304 = pneg %p201
        $region34: #{tpu_custom_call.1} parent=11 // pred_check_branch
          %306 = sbr.rel (%p304) target = $region36
        $region35: #{tpu_custom_call.1} parent=11 // pred_region
          _
        $region36: #{tpu_custom_call.1} parent=11 // pred_fallthru
          _
        // Predicated region
        $region37: #{tpu_custom_call.1} parent=11 // pred_check
          %p307 = pneg %p222
        $region38: #{tpu_custom_call.1} parent=11 // pred_check_branch
          %309 = sbr.rel (%p307) target = $region40
        $region39: #{tpu_custom_call.1} parent=11 // pred_region
          _
        $region40: #{tpu_custom_call.1} parent=11 // pred_fallthru
          _
      $region12: #{tpu_custom_call.1} parent=5 // pred_fallthru
        _
      %p310 = scmp.lt.s32.totalorder %s23, 2
      // Predicated region
      $region41: #{tpu_custom_call.1} parent=5 // pred_check
        %p311 = pneg %p310
      $region42: #{tpu_custom_call.1} parent=5 // pred_check_branch
        %313 = sbr.rel (%p311) target = $region44
      $region43: #{tpu_custom_call.1} parent=5 // pred_region
        // Predicated region
        $region45: #{tpu_custom_call.1} parent=43 // pred_check
          %p314 = pneg %p43
        $region46: #{tpu_custom_call.1} parent=43 // pred_check_branch
          %316 = sbr.rel (%p314) target = $region48
        $region47: #{tpu_custom_call.1} parent=43 // pred_region
          %p317 = scmp.lt.s32.totalorder %s23, 1
          %s318 = scalar_select %p317, %s23, 1
          %s319 = smul.addr %s318, 4
          %s320 = scalar_lea.vmem %s0, %s319
        $region48: #{tpu_custom_call.1} parent=43 // pred_fallthru
          _
        // Predicated region
        $region49: #{tpu_custom_call.1} parent=43 // pred_check
          %p321 = pneg %p69
        $region50: #{tpu_custom_call.1} parent=43 // pred_check_branch
          %323 = sbr.rel (%p321) target = $region52
        $region51: #{tpu_custom_call.1} parent=43 // pred_region
          %p324 = scmp.lt.s32.totalorder %s23, 1
          %s325 = scalar_select %p324, %s23, 1
          %s326 = smul.addr %s325, 4
          %s327 = scalar_lea.vmem %s1, %s326
        $region52: #{tpu_custom_call.1} parent=43 // pred_fallthru
          _
      $region44: #{tpu_custom_call.1} parent=5 // pred_fallthru
        _
      %p328 = scmp.le.s32.totalorder 1, %s23
      %p329 = scmp.lt.s32.totalorder %s23, 3
      %p330 = pnand %p328, %p329
      %p331 = pneg %p330
      // Predicated region
      $region53: #{tpu_custom_call.1} parent=5 // pred_check
        _
      $region54: #{tpu_custom_call.1} parent=5 // pred_check_branch
        %333 = sbr.rel (%p330) target = $region56
      $region55: #{tpu_custom_call.1} parent=5 // pred_region
        %s334 = ssub.s32 %s23, 1
        %p335 = scmp.lt.s32.totalorder %s28, 1
        %s336 = scalar_select %p335, %s28, 1
        %s337 = smul.addr %s336, 4
        %s338 = scalar_lea.vmem %s0, %s337
        %p339 = pneg %p49
        %p340 = pneg %p46
        %p341 = scmp.lt.s32.totalorder %s28, 1
        %s342 = scalar_select %p341, %s28, 1
        %s343 = smul.addr %s342, 4
        %s344 = scalar_lea.vmem %s1, %s343
        %p345 = pneg %p75
        %p346 = pneg %p72
        %p347 = pneg %p96
        %p348 = pneg %p93
        %p349 = pneg %p117
        %p350 = pneg %p114
        %p351 = pneg %p138
        %p352 = pneg %p135
        %p353 = pneg %p159
        %p354 = pneg %p156
        %p355 = pneg %p180
        %p356 = pneg %p177
        %p357 = pneg %p201
        %p358 = pneg %p198
        %p359 = pneg %p222
        %p360 = pneg %p219
        %p361 = pneg %p248
        %p362 = pneg %p245
        %s363 = sand.u32 %s235, 1
        %s364 = scalar_lea.sflag [#allocation5], %s363
        %s365 = sand.u32 %s235, 1
        %s366 = smul.addr %s365, 8
        %s367 = scalar_lea.vmem [#allocation4], %s366
        %p368 = pneg %p274
        %p369 = pneg %p271
        %s370 = sand.u32 %s261, 1
        %s371 = scalar_lea.sflag [#allocation7], %s370
        %s372 = sand.u32 %s261, 1
        %s373 = smul.addr %s372, 8
        %s374 = scalar_lea.vmem [#allocation6], %s373
        %p375 = scmp.lt.s32.totalorder %s28, 1
        %s376 = scalar_select %p375, %s28, 1
        %s377 = smul.addr %s376, 4
        %s378 = scalar_lea.vmem %s0, %s377
        %p379 = scmp.lt.s32.totalorder %s28, 1
        %s380 = scalar_select %p379, %s28, 1
        %s381 = smul.addr %s380, 4
        %s382 = scalar_lea.vmem %s1, %s381
        %v384 = vld [vmem:[%s5] sm:$0x1]
        %v385 = vld [vmem:[%s6] sm:$0x1]
        %v386 = vld [vmem:[%s7] sm:$0x1]
        %v387 = vld [vmem:[%s8] sm:$0x1]
        %v388 = vld [vmem:[%s2] sm:$0xf]
        %v389 = vld [vmem:[%s2 + $0x4] sm:$0xf]
        %v390 = vld [vmem:[%s2 + $0x8] sm:$0x3]
        %v391 = vld [vmem:[%s3] sm:$0xf]
        %v392 = vld [vmem:[%s3 + $0x4] sm:$0xf]
        %v393 = vld [vmem:[%s3 + $0x8] sm:$0xf]
        %v394 = vld [vmem:[%s3 + $0xc] sm:$0xf]
        %v395 = vld [vmem:[%s3 + $0x10] sm:$0xf]
        %v396 = vld [vmem:[%s4] sm:$0x3]
        %vm397 = vcmask 25600
        %398 = vst.msk [vmem:[#allocation2] sm:$0x3] %vm397, 0.0
        %399 = vst.msk [vmem:[#allocation2 + $0x12] sm:$0x3] %vm397, 0.0
        %vm400 = vcmask 58368
        %401 = vst.msk [vmem:[#allocation3] sm:$0x3] %vm400, 0.0
        %402 = vst.msk [vmem:[#allocation3 + $0x12] sm:$0x3] %vm400, 0.0
        %v403 = vld [vmem:[%s378] sm:$0xf]
        %404 = vxpose.xlu0.b32.start [1/16] %v403, 128
        %405 = vxpose.xlu0.b32.cont [2/16] 0.0, 128
        %406 = vxpose.xlu0.b32.cont [3/16] 0.0, 128
        %407 = vxpose.xlu0.b32.cont [4/16] 0.0, 128
        %408 = vxpose.xlu0.b32.cont [5/16] 0.0, 128
        %409 = vxpose.xlu0.b32.cont [6/16] 0.0, 128
        %410 = vxpose.xlu0.b32.cont [7/16] 0.0, 128
        %411 = vxpose.xlu0.b32.cont [8/16] 0.0, 128
        %412 = vxpose.xlu0.b32.cont [9/16] 0.0, 128
        %413 = vxpose.xlu0.b32.cont [10/16] 0.0, 128
        %414 = vxpose.xlu0.b32.cont [11/16] 0.0, 128
        %415 = vxpose.xlu0.b32.cont [12/16] 0.0, 128
        %416 = vxpose.xlu0.b32.cont [13/16] 0.0, 128
        %417 = vxpose.xlu0.b32.cont [14/16] 0.0, 128
        %418 = vxpose.xlu0.b32.cont [15/16] 0.0, 128
        %419 = vxpose.xlu0.b32.end [16/16] 0.0, 128
        %v420 = vpop.trf.xlu0
        %v421 = vpop.trf.xlu0
        %v422 = vpop.trf.xlu0
        %v423 = vpop.trf.xlu0
        %v424 = vpop.trf.xlu0
        %v425 = vpop.trf.xlu0
        %v426 = vpop.trf.xlu0
        %v427 = vpop.trf.xlu0
        %v428 = vpop.trf.xlu0
        %v429 = vpop.trf.xlu0
        %v430 = vpop.trf.xlu0
        %v431 = vpop.trf.xlu0
        %v432 = vpop.trf.xlu0
        %v433 = vpop.trf.xlu0
        %v434 = vpop.trf.xlu0
        %v435 = vpop.trf.xlu0
        %vm436 = vcmask 31744
        %437 = vst.msk [vmem:[#allocation2 + $0x2] sm:$0xff] %vm436, %v420
        %438 = vst.msk [vmem:[#allocation2 + $0xa] sm:$0xff] %vm436, %v421
        %v439 = vld [vmem:[#allocation2] sm:$0xff]
        %v440 = vld [vmem:[#allocation2 + $0x8] sm:$0xff]
        %v441 = vld [vmem:[#allocation2 + $0x10] sm:$0xf]
        %vm445 = vcmask 1046528
        %v446 = vrot.slane %v439, 1
        %v447 = vrot.slane %v440, 1
        %v448 = vsel %vm445, %v446, %v447
        %v449 = vrot.slane %v441, 1
        %v450 = vsel %vm445, %v447, %v449
        %451 = vrot.lane.b32.xlu0 %v448, 4
        %v452 = vpop.permute.xlu0 %451
        %453 = vrot.lane.b32.xlu0 %v450, 4
        %v454 = vpop.permute.xlu0 %453
        %vm457 = vcmask 1045504
        %v458 = vrot.slane %v439, 2
        %v459 = vrot.slane %v440, 2
        %v460 = vsel %vm457, %v458, %v459
        %v461 = vrot.slane %v441, 2
        %v462 = vsel %vm457, %v459, %v461
        %463 = vrot.lane.b32.xlu0 %v460, 8
        %v464 = vpop.permute.xlu0 %463
        %465 = vrot.lane.b32.xlu0 %v462, 8
        %v466 = vpop.permute.xlu0 %465
        %vm469 = vcmask 1044480
        %v470 = vrot.slane %v439, 3
        %v471 = vrot.slane %v440, 3
        %v472 = vsel %vm469, %v470, %v471
        %v473 = vrot.slane %v441, 3
        %v474 = vsel %vm469, %v471, %v473
        %475 = vrot.lane.b32.xlu0 %v472, 12
        %v476 = vpop.permute.xlu0 %475
        %477 = vrot.lane.b32.xlu0 %v474, 12
        %v478 = vpop.permute.xlu0 %477
        %vm481 = vcmask 1043456
        %v482 = vrot.slane %v439, 4
        %v483 = vrot.slane %v440, 4
        %v484 = vsel %vm481, %v482, %v483
        %v485 = vrot.slane %v441, 4
        %v486 = vsel %vm481, %v483, %v485
        %487 = vrot.lane.b32.xlu0 %v484, 16
        %v488 = vpop.permute.xlu0 %487
        %489 = vrot.lane.b32.xlu0 %v486, 16
        %v490 = vpop.permute.xlu0 %489
        %v493 = vsel %vm436, %v439, %v452
        %v494 = vsel %vm436, %v440, %v454
        %vm495 = vcmask 64512
        %v496 = vsel %vm495, %v493, %v464
        %v497 = vsel %vm495, %v494, %v466
        %vm498 = vcmask 97280
        %v499 = vsel %vm498, %v496, %v476
        %v500 = vsel %vm498, %v497, %v478
        %vm501 = vcmask 130048
        %v502 = vsel %vm501, %v499, %v488
        %v503 = vsel %vm501, %v500, %v490
        %v504 = vpack.c.bf16 %v503, %v502
        %v508 = vunpack.c.l.b16 %v388
        %v509 = vunpack.c.l.b16 %v389
        %v510 = vunpack.c.l.b16 %v390
        %v511 = vpack.c.b16 %v509, %v508
        %v512 = vpack.c.b16 %v510, %v510
        %vm514 = vcmask 162816
        %v516 = vsel %vm514, %v504, 0
        %vm518 = vcmask 1041408
        %v520 = vsel %vm518, %v512, 0
        %522 = vmatprep.subr.bf16.mxu0 0
        %523 = vmatpush1.bf16.msra.mxu0 0
        %524 = vmatprep.subr.bf16.mxu0 0
        %525 = vmatpush1.bf16.msra.mxu0 0
        %526 = vmatprep.subr.bf16.mxu0 0
        %527 = vmatpush1.bf16.msra.mxu0 0
        %528 = vmatprep.subr.bf16.mxu0 0
        %529 = vmatpush1.bf16.msra.mxu0 0
        %530 = vmatprep.subr.bf16.mxu0 0
        %531 = vmatpush1.bf16.msra.mxu0 0
        %532 = vmatprep.subr.bf16.mxu0 0
        %533 = vmatpush1.bf16.msra.mxu0 0
        %534 = vmatprep.subr.bf16.mxu0 0
        %535 = vmatpush1.bf16.msra.mxu0 %v520
        %536 = vmatprep.subr.bf16.mxu0 0
        %537 = vmatpush1.bf16.msra.mxu0 %v511
        %538 = vmatprep.subr.bf16.mxu0 0
        %539 = vmatpush2.bf16.msra.mxu0 0
        %540 = vmatprep.subr.bf16.mxu0 0
        %541 = vmatpush2.bf16.msra.mxu0 0
        %542 = vmatprep.subr.bf16.mxu0 0
        %543 = vmatpush2.bf16.msra.mxu0 0
        %544 = vmatprep.subr.bf16.mxu0 0
        %545 = vmatpush2.bf16.msra.mxu0 0
        %546 = vmatprep.subr.bf16.mxu0 0
        %547 = vmatpush2.bf16.msra.mxu0 0
        %548 = vmatprep.subr.bf16.mxu0 0
        %549 = vmatpush2.bf16.msra.mxu0 0
        %550 = vmatprep.subr.bf16.mxu0 0
        %551 = vmatpush2.bf16.msra.mxu0 0
        %552 = vmatprep.subr.bf16.mxu0 0
        %553 = vmatpush2.bf16.msra.mxu0 0
        %554 = vmatprep.mubr.bf16.mxu0 0
        %555 = vmatmul.mubr.bf16.gmra.mxu0 %v516
        %v556 = vpop.f32.mrf.mxu0
        %v557 = vadd.f32 0.0, %v556
        %v558 = vpop.f32.mrf.mxu0
        %v559 = vpop.f32.mrf.mxu0
        %v560 = vadd.f32 0.0, %v559
        %v561 = vpop.f32.mrf.mxu0
        %562 = vdwg.mxu0
        %v564 = vlaneseq
        %v565 = vshrl.u32 %v564, 7
        %v566 = vsub.s32 0, %v565
        %v567 = vrot.slane %v384, %v566
        %v569 = vmul.f32 %v557, %v567
        %v570 = vmul.f32 %v560, %v567
        %v572 = vlaneseq
        %v573 = vshrl.u32 %v572, 7
        %v574 = vsub.s32 0, %v573
        %v575 = vrot.slane %v385, %v574
        %v577 = vadd.f32 %v569, %v575
        %v578 = vadd.f32 %v570, %v575
        %v579 = vmax.f32 %v577, 0.0
        %v580 = vmax.f32 %v578, 0.0
        %v581 = vlaneseq
        %v582 = vshrl.u32 %v581, 7
        %v583 = vadd.s32 %v582, 8
        %vm584 = vcmp.lt.s32.totalorder %v582, 0
        %v585 = vsub.s32 0, %v582
        %v586 = vsel %vm584, %v585, %v582
        %v587 = vmul.u32.u64.compose %v586, 3435973837
        %v588 = vextract.low.u32 %v587
        %v589 = vextract.high.u32 %v587
        %v590 = vshrl.u32 %v589, 4
        %v591 = vmul.u32 %v590, 20
        %v592 = vsub.s32 %v586, %v591
        %v593 = vsub.s32 0, %v592
        %v594 = vsel %vm584, %v593, %v592
        %vm595 = vcmp.lt.s32.totalorder %v583, 0
        %v596 = vsub.s32 0, %v583
        %v597 = vsel %vm595, %v596, %v583
        %v598 = vmul.u32.u64.compose %v597, 3435973837
        %v599 = vextract.low.u32 %v598
        %v600 = vextract.high.u32 %v598
        %v601 = vshrl.u32 %v600, 4
        %v602 = vmul.u32 %v601, 20
        %v603 = vsub.s32 %v597, %v602
        %v604 = vsub.s32 0, %v603
        %v605 = vsel %vm595, %v604, %v603
        %vm606 = vcmp.ne.s32.totalorder %v594, 0
        %vm607 = vcmp.ne.s32.totalorder %v605, 0
        %vm608 = vcmp.lt.s32.totalorder %v594, 0
        %vm609 = vcmp.lt.s32.totalorder %v605, 0
        %vm610 = vmand %vm608, %vm606
        %vm611 = vmand %vm609, %vm607
        %v612 = vadd.s32 %v594, 20
        %v613 = vadd.s32 %v605, 20
        %v614 = vsel %vm610, %v612, %v594
        %v615 = vsel %vm611, %v613, %v605
        %vm616 = vcmp.lt.s32.totalorder %v614, 16
        %vm617 = vcmp.lt.s32.totalorder %v615, 16
        %v618 = vsel %vm616, 1, 0
        %v619 = vsel %vm617, 1, 0
        %vm620 = vcmp.eq.s32.totalorder %v618, 1
        %vm621 = vcmp.eq.s32.totalorder %v619, 1
        %v622 = vsel %vm620, %v579, 0.0
        %v623 = vsel %vm621, %v580, 0.0
        %624 = vst.msk [vmem:[#allocation3 + $0x2] sm:$0xff] %vm495, %v622
        %625 = vst.msk [vmem:[#allocation3 + $0xa] sm:$0xff] %vm495, %v623
        %v626 = vld [vmem:[#allocation3] ss:$2 sm:$0xff]
        %s627 = scalar_lea.vmem [#allocation3], 1
        %v628 = vld [vmem:[%s627] ss:$2 sm:$0xff]
        %s629 = scalar_lea.vmem [#allocation3], 2
        %v630 = vld [vmem:[%s629] ss:$2 sm:$0xff]
        %s631 = scalar_lea.vmem [#allocation3], 3
        %v632 = vld [vmem:[%s631] ss:$2 sm:$0xff]
        %s633 = scalar_lea.vmem [#allocation3], 4
        %v634 = vld [vmem:[%s633] ss:$2 sm:$0xff]
        %636 = vrot.lane.b32.xlu0 %v628, 8
        %v637 = vpop.permute.xlu0 %636
        %640 = vrot.lane.b32.xlu0 %v630, 16
        %v641 = vpop.permute.xlu0 %640
        %644 = vrot.lane.b32.xlu0 %v632, 24
        %v645 = vpop.permute.xlu0 %644
        %648 = vrot.lane.b32.xlu0 %v634, 32
        %v649 = vpop.permute.xlu0 %648
        %v651 = vsel %vm495, %v626, %v637
        %v652 = vsel %vm501, %v651, %v641
        %vm653 = vcmask 195584
        %v654 = vsel %vm653, %v652, %v645
        %vm655 = vcmask 261120
        %v656 = vsel %vm655, %v654, %v649
        %v657 = vpack.c.bf16 %v656, %v656
        %v658 = vld [vmem:[%s382] sm:$0xf]
        %659 = vxpose.xlu0.b32.start [1/16] %v658, 128
        %660 = vxpose.xlu0.b32.cont [2/16] 0.0, 128
        %661 = vxpose.xlu0.b32.cont [3/16] 0.0, 128
        %662 = vxpose.xlu0.b32.cont [4/16] 0.0, 128
        %663 = vxpose.xlu0.b32.cont [5/16] 0.0, 128
        %664 = vxpose.xlu0.b32.cont [6/16] 0.0, 128
        %665 = vxpose.xlu0.b32.cont [7/16] 0.0, 128
        %666 = vxpose.xlu0.b32.cont [8/16] 0.0, 128
        %667 = vxpose.xlu0.b32.cont [9/16] 0.0, 128
        %668 = vxpose.xlu0.b32.cont [10/16] 0.0, 128
        %669 = vxpose.xlu0.b32.cont [11/16] 0.0, 128
        %670 = vxpose.xlu0.b32.cont [12/16] 0.0, 128
        %671 = vxpose.xlu0.b32.cont [13/16] 0.0, 128
        %672 = vxpose.xlu0.b32.cont [14/16] 0.0, 128
        %673 = vxpose.xlu0.b32.cont [15/16] 0.0, 128
        %674 = vxpose.xlu0.b32.end [16/16] 0.0, 128
        %v675 = vpop.trf.xlu0
        %v676 = vpop.trf.xlu0
        %v677 = vpop.trf.xlu0
        %v678 = vpop.trf.xlu0
        %v679 = vpop.trf.xlu0
        %v680 = vpop.trf.xlu0
        %v681 = vpop.trf.xlu0
        %v682 = vpop.trf.xlu0
        %v683 = vpop.trf.xlu0
        %v684 = vpop.trf.xlu0
        %v685 = vpop.trf.xlu0
        %v686 = vpop.trf.xlu0
        %v687 = vpop.trf.xlu0
        %v688 = vpop.trf.xlu0
        %v689 = vpop.trf.xlu0
        %v690 = vpop.trf.xlu0
        %691 = vst.msk [vmem:[#allocation2 + $0x2] sm:$0xff] %vm436, %v675
        %692 = vst.msk [vmem:[#allocation2 + $0xa] sm:$0xff] %vm436, %v676
        %s693 = scalar_lea.vmem [#allocation2], 2
        %v694 = vld [vmem:[%s693] ss:$2 sm:$0xff]
        %s695 = scalar_lea.vmem [#allocation2], 3
        %v696 = vld [vmem:[%s695] ss:$2 sm:$0xff]
        %v697 = vmax.f32 %v694, %v696
        %v698 = vpack.c.bf16 %v697, %v697
        %v700 = vsel %vm436, %v698, 0
        %v703 = vsel %vm518, %v396, 0
        %705 = vmatprep.subr.bf16.mxu0 0
        %706 = vmatpush1.bf16.msra.mxu0 0
        %707 = vmatprep.subr.bf16.mxu0 0
        %708 = vmatpush1.bf16.msra.mxu0 0
        %709 = vmatprep.subr.bf16.mxu0 0
        %710 = vmatpush1.bf16.msra.mxu0 0
        %711 = vmatprep.subr.bf16.mxu0 0
        %712 = vmatpush1.bf16.msra.mxu0 0
        %713 = vmatprep.subr.bf16.mxu0 0
        %714 = vmatpush1.bf16.msra.mxu0 0
        %715 = vmatprep.subr.bf16.mxu0 0
        %716 = vmatpush1.bf16.msra.mxu0 0
        %717 = vmatprep.subr.bf16.mxu0 0
        %718 = vmatpush1.bf16.msra.mxu0 0
        %719 = vmatprep.subr.bf16.mxu0 0
        %720 = vmatpush1.bf16.msra.mxu0 %v703
        %721 = vmatprep.subr.bf16.mxu0 0
        %722 = vmatpush2.bf16.msra.mxu0 0
        %723 = vmatprep.subr.bf16.mxu0 0
        %724 = vmatpush2.bf16.msra.mxu0 0
        %725 = vmatprep.subr.bf16.mxu0 0
        %726 = vmatpush2.bf16.msra.mxu0 0
        %727 = vmatprep.subr.bf16.mxu0 0
        %728 = vmatpush2.bf16.msra.mxu0 0
        %729 = vmatprep.subr.bf16.mxu0 0
        %730 = vmatpush2.bf16.msra.mxu0 0
        %731 = vmatprep.subr.bf16.mxu0 0
        %732 = vmatpush2.bf16.msra.mxu0 0
        %733 = vmatprep.subr.bf16.mxu0 0
        %734 = vmatpush2.bf16.msra.mxu0 0
        %735 = vmatprep.subr.bf16.mxu0 0
        %736 = vmatpush2.bf16.msra.mxu0 0
        %737 = vmatprep.mubr.bf16.mxu0 0
        %738 = vmatmul.mubr.bf16.gmra.mxu0 %v700
        %v739 = vpop.f32.mrf.mxu0
        %v740 = vadd.f32 0.0, %v739
        %v741 = vpop.f32.mrf.mxu0
        %v742 = vpop.f32.mrf.mxu0
        %v743 = vpop.f32.mrf.mxu0
        %744 = vdwg.mxu0
        %v750 = vunpack.c.l.b16 %v391
        %v751 = vunpack.c.l.b16 %v392
        %v752 = vunpack.c.l.b16 %v393
        %v753 = vunpack.c.l.b16 %v394
        %v754 = vunpack.c.l.b16 %v395
        %v755 = vpack.c.b16 %v751, %v750
        %v756 = vpack.c.b16 %v753, %v752
        %v757 = vpack.c.b16 %v754, %v754
        %vm760 = vcmask 326656
        %v762 = vsel %vm760, %v657, 0
        %v765 = vsel %vm481, %v757, 0
        %767 = vmatprep.subr.bf16.mxu0 0
        %768 = vmatpush1.bf16.msra.mxu0 0
        %769 = vmatprep.subr.bf16.mxu0 0
        %770 = vmatpush1.bf16.msra.mxu0 0
        %771 = vmatprep.subr.bf16.mxu0 0
        %772 = vmatpush1.bf16.msra.mxu0 0
        %773 = vmatprep.subr.bf16.mxu0 0
        %774 = vmatpush1.bf16.msra.mxu0 0
        %775 = vmatprep.subr.bf16.mxu0 0
        %776 = vmatpush1.bf16.msra.mxu0 0
        %777 = vmatprep.subr.bf16.mxu0 0
        %778 = vmatpush1.bf16.msra.mxu0 %v765
        %779 = vmatprep.subr.bf16.mxu0 0
        %780 = vmatpush1.bf16.msra.mxu0 %v756
        %781 = vmatprep.subr.bf16.mxu0 0
        %782 = vmatpush1.bf16.msra.mxu0 %v755
        %783 = vmatprep.subr.bf16.mxu0 0
        %784 = vmatpush2.bf16.msra.mxu0 0
        %785 = vmatprep.subr.bf16.mxu0 0
        %786 = vmatpush2.bf16.msra.mxu0 0
        %787 = vmatprep.subr.bf16.mxu0 0
        %788 = vmatpush2.bf16.msra.mxu0 0
        %789 = vmatprep.subr.bf16.mxu0 0
        %790 = vmatpush2.bf16.msra.mxu0 0
        %791 = vmatprep.subr.bf16.mxu0 0
        %792 = vmatpush2.bf16.msra.mxu0 0
        %793 = vmatprep.subr.bf16.mxu0 0
        %794 = vmatpush2.bf16.msra.mxu0 0
        %795 = vmatprep.subr.bf16.mxu0 0
        %796 = vmatpush2.bf16.msra.mxu0 0
        %797 = vmatprep.subr.bf16.mxu0 0
        %798 = vmatpush2.bf16.msra.mxu0 0
        %799 = vmatprep.mubr.bf16.mxu0 0
        %800 = vmatmul.mubr.bf16.gmra.mxu0 %v762
        %v801 = vpop.f32.mrf.mxu0
        %v802 = vadd.f32 %v740, %v801
        %v803 = vpop.f32.mrf.mxu0
        %v804 = vpop.f32.mrf.mxu0
        %v805 = vpop.f32.mrf.mxu0
        %806 = vdwg.mxu0
        %v808 = vlaneseq
        %v809 = vshrl.u32 %v808, 7
        %v810 = vsub.s32 0, %v809
        %v811 = vrot.slane %v386, %v810
        %v813 = vmul.f32 %v802, %v811
        %v815 = vlaneseq
        %v816 = vshrl.u32 %v815, 7
        %v817 = vsub.s32 0, %v816
        %v818 = vrot.slane %v387, %v817
        %v820 = vadd.f32 %v813, %v818
        %v821 = vmax.f32 %v820, 0.0
        %822 = vxpose.xlu0.b32.start [1/16] %v802, 128
        %823 = vxpose.xlu0.b32.cont [2/16] 0.0, 128
        %824 = vxpose.xlu0.b32.cont [3/16] 0.0, 128
        %825 = vxpose.xlu0.b32.cont [4/16] 0.0, 128
        %826 = vxpose.xlu0.b32.cont [5/16] 0.0, 128
        %827 = vxpose.xlu0.b32.cont [6/16] 0.0, 128
        %828 = vxpose.xlu0.b32.cont [7/16] 0.0, 128
        %829 = vxpose.xlu0.b32.cont [8/16] 0.0, 128
        %830 = vxpose.xlu0.b32.cont [9/16] 0.0, 128
        %831 = vxpose.xlu0.b32.cont [10/16] 0.0, 128
        %832 = vxpose.xlu0.b32.cont [11/16] 0.0, 128
        %833 = vxpose.xlu0.b32.cont [12/16] 0.0, 128
        %834 = vxpose.xlu0.b32.cont [13/16] 0.0, 128
        %835 = vxpose.xlu0.b32.cont [14/16] 0.0, 128
        %836 = vxpose.xlu0.b32.cont [15/16] 0.0, 128
        %837 = vxpose.xlu0.b32.end [16/16] 0.0, 128
        %v838 = vpop.trf.xlu0
        %v839 = vpop.trf.xlu0
        %v840 = vpop.trf.xlu0
        %v841 = vpop.trf.xlu0
        %v842 = vpop.trf.xlu0
        %v843 = vpop.trf.xlu0
        %v844 = vpop.trf.xlu0
        %v845 = vpop.trf.xlu0
        %v846 = vpop.trf.xlu0
        %v847 = vpop.trf.xlu0
        %v848 = vpop.trf.xlu0
        %v849 = vpop.trf.xlu0
        %v850 = vpop.trf.xlu0
        %v851 = vpop.trf.xlu0
        %v852 = vpop.trf.xlu0
        %v853 = vpop.trf.xlu0
        %854 = vst.msk [vmem:[%s374] sm:$0xff] %vm495, %v838
        %855 = vxpose.xlu0.b32.start [1/16] %v821, 128
        %856 = vxpose.xlu0.b32.cont [2/16] 0.0, 128
        %857 = vxpose.xlu0.b32.cont [3/16] 0.0, 128
        %858 = vxpose.xlu0.b32.cont [4/16] 0.0, 128
        %859 = vxpose.xlu0.b32.cont [5/16] 0.0, 128
        %860 = vxpose.xlu0.b32.cont [6/16] 0.0, 128
        %861 = vxpose.xlu0.b32.cont [7/16] 0.0, 128
        %862 = vxpose.xlu0.b32.cont [8/16] 0.0, 128
        %863 = vxpose.xlu0.b32.cont [9/16] 0.0, 128
        %864 = vxpose.xlu0.b32.cont [10/16] 0.0, 128
        %865 = vxpose.xlu0.b32.cont [11/16] 0.0, 128
        %866 = vxpose.xlu0.b32.cont [12/16] 0.0, 128
        %867 = vxpose.xlu0.b32.cont [13/16] 0.0, 128
        %868 = vxpose.xlu0.b32.cont [14/16] 0.0, 128
        %869 = vxpose.xlu0.b32.cont [15/16] 0.0, 128
        %870 = vxpose.xlu0.b32.end [16/16] 0.0, 128
        %v871 = vpop.trf.xlu0
        %v872 = vpop.trf.xlu0
        %v873 = vpop.trf.xlu0
        %v874 = vpop.trf.xlu0
        %v875 = vpop.trf.xlu0
        %v876 = vpop.trf.xlu0
        %v877 = vpop.trf.xlu0
        %v878 = vpop.trf.xlu0
        %v879 = vpop.trf.xlu0
        %v880 = vpop.trf.xlu0
        %v881 = vpop.trf.xlu0
        %v882 = vpop.trf.xlu0
        %v883 = vpop.trf.xlu0
        %v884 = vpop.trf.xlu0
        %v885 = vpop.trf.xlu0
        %v886 = vpop.trf.xlu0
        %887 = vst.msk [vmem:[%s367] sm:$0xff] %vm495, %v871
        %s888 = sand.u32 %s235, 1
        %s889 = scalar_lea.sflag [#allocation5], %s888
        %s890 = sand.u32 %s235, 1
        %s891 = smul.addr %s890, 8
        %s892 = scalar_lea.vmem [#allocation4], %s891
        %s893 = sand.u32 %s261, 1
        %s894 = scalar_lea.sflag [#allocation7], %s893
        %s895 = sand.u32 %s261, 1
        %s896 = smul.addr %s895, 8
        %s897 = scalar_lea.vmem [#allocation6], %s896
        // Predicated region
        $region57: #{tpu_custom_call.1} parent=55 // pred_check
          %p898 = pneg %p245
        $region58: #{tpu_custom_call.1} parent=55 // pred_check_branch
          %900 = sbr.rel (%p898) target = $region60
        $region59: #{tpu_custom_call.1} parent=55 // pred_region
          %s902 = ssub.s32 128, 128
          %903 = vsyncadd %s889, %s902
          %s904 = smul.addr %s28, 128
          %s905 = scalar_lea.hbm %s9, %s904
          %s907 = sshll.u32 %s892, 4
          %s908 = int_to_ptr.vmem [resolvable:$true] %s907
          %910 = dma.vmem_to_hbm [thread:$0]  %s908, 128, %s905, %s889
        $region60: #{tpu_custom_call.1} parent=55 // pred_fallthru
          _
        // Predicated region
        $region61: #{tpu_custom_call.1} parent=55 // pred_check
          %p911 = pneg %p271
        $region62: #{tpu_custom_call.1} parent=55 // pred_check_branch
          %913 = sbr.rel (%p911) target = $region64
        $region63: #{tpu_custom_call.1} parent=55 // pred_region
          %s915 = ssub.s32 128, 128
          %916 = vsyncadd %s894, %s915
          %s917 = smul.addr %s28, 128
          %s918 = scalar_lea.hbm %s10, %s917
          %s920 = sshll.u32 %s897, 4
          %s921 = int_to_ptr.vmem [resolvable:$true] %s920
          %923 = dma.vmem_to_hbm [thread:$0]  %s921, 128, %s918, %s894
        $region64: #{tpu_custom_call.1} parent=55 // pred_fallthru
          _
      $region56: #{tpu_custom_call.1} parent=5 // pred_fallthru
        _
      %p924 = scmp.le.s32.totalorder 2, %s23
      // Predicated region
      $region65: #{tpu_custom_call.1} parent=5 // pred_check
        %p925 = pneg %p924
      $region66: #{tpu_custom_call.1} parent=5 // pred_check_branch
        %927 = sbr.rel (%p925) target = $region68
      $region67: #{tpu_custom_call.1} parent=5 // pred_region
        %s928 = ssub.s32 %s23, 2
        // Predicated region
        $region69: #{tpu_custom_call.1} parent=67 // pred_check
          %p929 = pneg %p251
        $region70: #{tpu_custom_call.1} parent=67 // pred_check_branch
          %931 = sbr.rel (%p929) target = $region72
        $region71: #{tpu_custom_call.1} parent=67 // pred_region
          %s932 = sand.u32 %s236, 1
          %s933 = scalar_lea.sflag [#allocation5], %s932
          %s934 = sand.u32 %s236, 1
          %s935 = smul.addr %s934, 8
          %s936 = scalar_lea.vmem [#allocation4], %s935
          %937 = dma.done %s933, 128
        $region72: #{tpu_custom_call.1} parent=67 // pred_fallthru
          _
        // Predicated region
        $region73: #{tpu_custom_call.1} parent=67 // pred_check
          %p938 = pneg %p277
        $region74: #{tpu_custom_call.1} parent=67 // pred_check_branch
          %940 = sbr.rel (%p938) target = $region76
        $region75: #{tpu_custom_call.1} parent=67 // pred_region
          %s941 = sand.u32 %s262, 1
          %s942 = scalar_lea.sflag [#allocation7], %s941
          %s943 = sand.u32 %s262, 1
          %s944 = smul.addr %s943, 8
          %s945 = scalar_lea.vmem [#allocation6], %s944
          %946 = dma.done %s942, 128
        $region76: #{tpu_custom_call.1} parent=67 // pred_fallthru
          _
      $region68: #{tpu_custom_call.1} parent=5 // pred_fallthru
        _
    $region6: #{tpu_custom_call.1} parent=1 // loop_footer
      %s27 = sadd.s32 1, %s23
    $region7: #{tpu_custom_call.1} parent=1 // loop_footer_branch
      %22 = sbr.rel target = $region3
    $region8: #{tpu_custom_call.1} parent=1 // loop_exit
      _
    %947 = vsyncpa [#allocation5], 1
    %s948 = scalar_lea.sflag [#allocation5], 1
    %949 = vsyncpa %s948, 1
    %950 = vsyncpa [#allocation7], 1
    %s951 = scalar_lea.sflag [#allocation7], 1
    %952 = vsyncpa %s951, 1

</llo_original>
